<compile_context>
chip_gen: v7x
topology: tpu7x:2x2x1
jax: 0.10.0
libtpu: 0.0.40
codegen_flags: <defaults>
</compile_context>

<pallas_src>
import functools

import jax
import jax.numpy as jnp
from jax import lax
from jax.experimental import pallas as pl
from jax.experimental.pallas import tpu as pltpu

LANES = 128
MAX_BLOCK_ROWS = 8192  # 8192 x 128 f32 = 4 MiB per input block


def _simse_partial_kernel(pred_ref, real_ref, out_ref, acc_ref, *,
                          block_rows, inner, n_elems, needs_mask):
    i = pl.program_id(1)

    d = real_ref[...].astype(jnp.float32) - pred_ref[...].astype(jnp.float32)

    if needs_mask:
        # Global flat element index of every entry in this *logical* block.
        # Entries at/after n_elems (lane-pad, partial edge block, or a clamped
        # "wasted" step of an uneven chunk split) contribute zero.
        p = pl.program_id(0)
        blk = p * inner + i
        row0 = blk * block_rows
        row_ids = row0 + lax.broadcasted_iota(jnp.int32, d.shape, 0)
        lane_ids = lax.broadcasted_iota(jnp.int32, d.shape, 1)
        flat_ids = row_ids * LANES + lane_ids
        d = jnp.where(flat_ids < n_elems, d, jnp.float32(0.0))

    if inner == 1:
        # Single step per chunk: no carried accumulator needed.
        out_ref[0, 0] = jnp.sum(d)
    else:
        @pl.when(i == 0)
        def _():
            acc_ref[...] = jnp.zeros_like(acc_ref)

        # Elementwise (VPU-only) accumulation each step; the full reduction to a
        # scalar is paid exactly once per chunk, on the last step.
        acc_ref[...] += d

        @pl.when(i == inner - 1)
        def _():
            out_ref[0, 0] = jnp.sum(acc_ref[...])


def simse(pred: jax.Array, real: jax.Array,
          max_block_rows: int = MAX_BLOCK_ROWS) -> jax.Array:
    assert pred.shape == real.shape, "pred and real must have the same shape"
    assert max_block_rows % 8 == 0
    n = int(pred.size)  # torch.numel(diffs)

    rows = pl.cdiv(n, LANES)
    padded = rows * LANES

    p_flat = pred.reshape(-1)
    r_flat = real.reshape(-1)
    if padded != n:
        # Rare misaligned path: pad by < 128 elements so the lane-dense (rows,128)
        # reshape is legal. The padded tail is masked out in-kernel anyway; this is
        # the only data copy the wrapper ever makes (no tile-multiple padding).
        p_flat = jnp.pad(p_flat, (0, padded - n))
        r_flat = jnp.pad(r_flat, (0, padded - n))
    p2d = p_flat.reshape(rows, LANES)
    r2d = r_flat.reshape(rows, LANES)

    # Large fixed row-tile (full extent if it fits) — no divisor search.
    block_rows = rows if rows <= max_block_rows else max_block_rows
    total_blocks = pl.cdiv(rows, block_rows)

    # Leading "parallel" chunk axis: lets v7x's two TensorCores each stream half
    # of the blocks (sequential / no effect on single-TC v5e & v6e). Only split
    # when the wasted (clamped + fully-masked) grid steps are zero or negligible.
    if total_blocks >= 2 and (total_blocks % 2 == 0 or total_blocks >= 16):
        num_chunks = 2
    else:
        num_chunks = 1
    inner = pl.cdiv(total_blocks, num_chunks)

    # Mask needed iff the logical grid covers more elements than actually exist.
    needs_mask = (num_chunks * inner * block_rows * LANES) != n
    last_block = total_blocks - 1

    def in_map(p, i):
        blk = p * inner + i
        # Clamp so a wasted trailing step of an uneven split re-reads the last
        # valid block; its contribution is masked to zero inside the kernel.
        return (jnp.minimum(blk, last_block), 0)

    kernel = functools.partial(
        _simse_partial_kernel,
        block_rows=block_rows, inner=inner, n_elems=n, needs_mask=needs_mask)

    in_bytes = (p2d.size * p2d.dtype.itemsize) + (r2d.size * r2d.dtype.itemsize)

    partials = pl.pallas_call(
        kernel,
        out_shape=jax.ShapeDtypeStruct((num_chunks, 1), jnp.float32),
        grid_spec=pltpu.PrefetchScalarGridSpec(
            num_scalar_prefetch=0,
            grid=(num_chunks, inner),
            in_specs=[
                pl.BlockSpec((block_rows, LANES), in_map),
                pl.BlockSpec((block_rows, LANES), in_map),
            ],
            out_specs=pl.BlockSpec((1, 1), lambda p, i: (p, 0),
                                   memory_space=pltpu.SMEM),
            scratch_shapes=[pltpu.VMEM((block_rows, LANES), jnp.float32)],
        ),
        compiler_params=pltpu.CompilerParams(
            dimension_semantics=("parallel", "arbitrary"),
            # 2 inputs x 2 buffers x 4 MiB + 4 MiB accumulator ~= 20 MiB; raise the
            # scoped limit so v5e's 16 MiB default is not a constraint.
            vmem_limit_bytes=32 * 1024 * 1024,
        ),
        cost_estimate=pl.CostEstimate(
            flops=2 * n,
            transcendentals=0,
            bytes_accessed=in_bytes + 4 * num_chunks,
        ),
    )(p2d, r2d)

    s = jnp.sum(partials)
    # (s / n)^2 == s^2 / n^2, but better conditioned in f32.
    return (s / jnp.float32(n)) ** 2


def _ref_simse(pred, real):
    diffs = real - pred
    n = diffs.size
    return (jnp.sum(diffs) ** 2) / (n ** 2)


if __name__ == "__main__":
    key = jax.random.PRNGKey(0)

    def check(shape, max_block_rows=MAX_BLOCK_ROWS):
        k1, k2 = jax.random.split(jax.random.fold_in(key, hash(shape) & 0xFFFF))
        pred = jax.random.normal(k1, shape, dtype=jnp.float32)
        real = jax.random.normal(k2, shape, dtype=jnp.float32)
        out = simse(pred, real, max_block_rows=max_block_rows)
        jax.block_until_ready(out)
        ref = _ref_simse(pred, real)
        assert jnp.allclose(out, ref, rtol=1e-4, atol=1e-6), (shape, out, ref)
        return out

    # Primary example: small NCHW-like shape (aligned fast path, single block).
    check((2, 4, 16, 16))
    # Misaligned element count -> in-kernel lane-tail masking.
    check((3, 5, 7, 11))
    # Two even blocks -> parallel chunk split (P=2, inner=1).
    check((2, 4, 16, 16), max_block_rows=8)
    # Odd block count with partial edge block -> accumulator loop + masking.
    check((2, 5, 16, 16), max_block_rows=8)
    # Odd block count >= 16 -> chunk split with one clamped+masked wasted step.
    check((136, 128), max_block_rows=8)

    print("KERNEL_OK")
</pallas_src>

<mosaic_0001>
module attributes {stable_mosaic.version = 11 : i64} {
  func.func @_simse_partial_kernel(%arg0: i32, %arg1: i32, %arg2: memref<16x128xf32, #tpu.memory_space<vmem>>, %arg3: memref<16x128xf32, #tpu.memory_space<vmem>>, %arg4: memref<1x1xf32, #tpu.memory_space<smem>>, %arg5: memref<16x128xf32, #tpu.memory_space<vmem>>) attributes {dimension_semantics = [#tpu.dimension_semantics<parallel>, #tpu.dimension_semantics<arbitrary>], iteration_bounds = array<i64: 1, 1>, scalar_prefetch = 0 : i64, scratch_operands = 1 : i64, tpu.core_type = #tpu.core_type<tc>, window_params = [{transform_indices = @transform_0, window_bounds = array<i64: 16, 128>}, {transform_indices = @transform_1, window_bounds = array<i64: 16, 128>}, {transform_indices = @transform_2, window_bounds = array<i64: 1, 1>}]} {
    %c0 = arith.constant 0 : index
    %c0_0 = arith.constant 0 : index
    %0 = vector.load %arg3[%c0, %c0_0] : memref<16x128xf32, #tpu.memory_space<vmem>>, vector<16x128xf32>
    %c0_1 = arith.constant 0 : index
    %c0_2 = arith.constant 0 : index
    %1 = vector.load %arg2[%c0_1, %c0_2] : memref<16x128xf32, #tpu.memory_space<vmem>>, vector<16x128xf32>
    %2 = arith.subf %0, %1 : vector<16x128xf32>
    %3 = vector.shape_cast %2 : vector<16x128xf32> to vector<1x16x128xf32>
    %cst = arith.constant dense<0.000000e+00> : vector<1xf32>
    %4 = vector.multi_reduction <add>, %3, %cst [1, 2] : vector<1x16x128xf32> to vector<1xf32>
    %5 = vector.shape_cast %4 : vector<1xf32> to vector<1x1x1xf32>
    %6 = vector.extract %5[0, 0, 0] : f32 from vector<1x1x1xf32>
    %c0_3 = arith.constant 0 : index
    %c0_4 = arith.constant 0 : index
    %7 = memref.load %arg4[%c0_3, %c0_4] : memref<1x1xf32, #tpu.memory_space<smem>>
    memref.store %6, %arg4[%c0_3, %c0_4] : memref<1x1xf32, #tpu.memory_space<smem>>
    return
  }
  func.func @transform_0(%arg0: i32, %arg1: i32) -> (i32, i32) {
    %c1_i32 = arith.constant 1 : i32
    %0 = arith.muli %arg0, %c1_i32 : i32
    %1 = arith.addi %0, %arg1 : i32
    %c0_i32 = arith.constant 0 : i32
    %2 = arith.minsi %1, %c0_i32 : i32
    %c0_i32_0 = arith.constant 0 : i32
    %c0_i32_1 = arith.constant 0 : i32
    return %2, %c0_i32_0 : i32, i32
  }
  func.func @transform_1(%arg0: i32, %arg1: i32) -> (i32, i32) {
    %c1_i32 = arith.constant 1 : i32
    %0 = arith.muli %arg0, %c1_i32 : i32
    %1 = arith.addi %0, %arg1 : i32
    %c0_i32 = arith.constant 0 : i32
    %2 = arith.minsi %1, %c0_i32 : i32
    %c0_i32_0 = arith.constant 0 : i32
    %c0_i32_1 = arith.constant 0 : i32
    return %2, %c0_i32_0 : i32, i32
  }
  func.func @transform_2(%arg0: i32, %arg1: i32) -> (i32, i32) {
    %c0_i32 = arith.constant 0 : i32
    %c0_i32_0 = arith.constant 0 : i32
    return %arg0, %c0_i32 : i32, i32
  }
}

</mosaic_0001>

<llo_original>
// kernel: tpu_custom_call.1
$region0: #{tpu_custom_call.1}
  #allocation0 [shape = 'u32[]', space=smem, size = 0x4, offset = 0x4, fixed_abs, tag = 'smem constant byte address 0x4 - core index']
  #allocation1 [shape = 'u32[144,128]{1,0:T(1,128)}', space=vmem, size = 0x12000, scoped, tag = 'internal scratch']
  #allocation2 [shape = 'f32[16,128]{1,0:T(8,128)}', space=vmem, size = 0x2000, scoped, tag = 'scratch operand']
  %s0 = inlined_call_operand.hbm [shape: f32[16,128], index: 0, kind: input, shape index: {}]
  %s1 = inlined_call_operand.hbm [shape: f32[16,128], index: 1, kind: input, shape index: {}]
  %s2 = inlined_call_operand.hbm [shape: f32[1,1], index: 2, kind: output, shape index: {}]
  %s3 = sld [smem:[#allocation0]]
  $region26: #{tpu_custom_call.1} parent=0
    _
  %s5 = ssub.s32 1, %s3
  %s6 = scalar_select 0, %s5, %s3
  $region1: #{tpu_custom_call.1} parent=0
    #allocation3 [shape = 'u8[8192]{0}', space=vmem, size = 0x2000, scoped, tag = 'input window, operand 0, single buffered']
    #allocation4 [shape = 's32[1]{0}', space=sflag, size = 0x4, scoped, tag = 'scoped memory for tpu_custom_call.1']
    #allocation5 [shape = 's32[1]{0}', space=sflag, size = 0x4, scoped, tag = 'scoped memory for tpu_custom_call.1']
    #allocation6 [shape = 'u8[8192]{0}', space=vmem, size = 0x2000, scoped, tag = 'input window, operand 1, single buffered']
    #allocation7 [shape = 's32[1]{0}', space=sflag, size = 0x4, scoped, tag = 'scoped memory for tpu_custom_call.1']
    #allocation8 [shape = 'u8[512]{0}', space=smem, size = 0x200, scoped, tag = 'output window, operand 0, single buffered']
    %7 = vsyncpa [#allocation4], 0
    %8 = vsyncpa [#allocation7], 0
    %9 = vsyncpa [#allocation5], 0
    // Predicated region
    $region2: #{tpu_custom_call.1} parent=1 // pred_check
      _
    $region3: #{tpu_custom_call.1} parent=1 // pred_check_branch
      %11 = sbr.rel (0) target = $region5
    $region4: #{tpu_custom_call.1} parent=1 // pred_region
      %s12 = sadd.s32 0, 0
      %p13 = scmp.lt.s32.totalorder %s12, 0
      %s14 = scalar_select %p13, %s12, 0
      %s15 = smul.u32 2, %s14
      %s17 = ssub.s32 256, 256
      %18 = vsyncadd [#allocation4], %s17
      %s19 = smul.addr %s15, 128
      %s20 = scalar_lea.hbm %s0, %s19
      %s21 = sshll.u32 [#allocation3], 4
      %s22 = int_to_ptr.vmem [resolvable:$true] %s21
      %27 = dma.hbm_to_vmem [thread:$0]  %s20, 256, %s22, [#allocation4], 128, 128, 8
    $region5: #{tpu_custom_call.1} parent=1 // pred_fallthru
      _
    // Predicated region
    $region6: #{tpu_custom_call.1} parent=1 // pred_check
      _
    $region7: #{tpu_custom_call.1} parent=1 // pred_check_branch
      %29 = sbr.rel (0) target = $region9
    $region8: #{tpu_custom_call.1} parent=1 // pred_region
      %s30 = sadd.s32 0, 0
      %p31 = scmp.lt.s32.totalorder %s30, 0
      %s32 = scalar_select %p31, %s30, 0
      %s33 = smul.u32 2, %s32
      %s35 = ssub.s32 256, 256
      %36 = vsyncadd [#allocation7], %s35
      %s37 = smul.addr %s33, 128
      %s38 = scalar_lea.hbm %s1, %s37
      %s39 = sshll.u32 [#allocation6], 4
      %s40 = int_to_ptr.vmem [resolvable:$true] %s39
      %45 = dma.hbm_to_vmem [thread:$0]  %s38, 256, %s40, [#allocation7], 128, 128, 8
    $region9: #{tpu_custom_call.1} parent=1 // pred_fallthru
      _
    // Predicated region
    $region10: #{tpu_custom_call.1} parent=1 // pred_check
      _
    $region11: #{tpu_custom_call.1} parent=1 // pred_check_branch
      %47 = sbr.rel (0) target = $region13
    $region12: #{tpu_custom_call.1} parent=1 // pred_region
      %48 = dma.done [#allocation4], 256
    $region13: #{tpu_custom_call.1} parent=1 // pred_fallthru
      _
    // Predicated region
    $region14: #{tpu_custom_call.1} parent=1 // pred_check
      _
    $region15: #{tpu_custom_call.1} parent=1 // pred_check_branch
      %50 = sbr.rel (0) target = $region17
    $region16: #{tpu_custom_call.1} parent=1 // pred_region
      %51 = dma.done [#allocation7], 256
    $region17: #{tpu_custom_call.1} parent=1 // pred_fallthru
      _
    %s52 = sadd.s32 0, 0
    %p53 = scmp.lt.s32.totalorder %s52, 0
    %s54 = scalar_select %p53, %s52, 0
    %s55 = smul.u32 2, %s54
    %s56 = sadd.s32 0, 0
    %p57 = scmp.lt.s32.totalorder %s56, 0
    %s58 = scalar_select %p57, %s56, 0
    %s59 = smul.u32 2, %s58
    %v60 = vld [vmem:[#allocation6] sm:$0xff]
    %v61 = vld [vmem:[#allocation6 + $0x8] sm:$0xff]
    %v62 = vld [vmem:[#allocation3] sm:$0xff]
    %v63 = vld [vmem:[#allocation3 + $0x8] sm:$0xff]
    %v64 = vsub.f32 %v60, %v62
    %v65 = vsub.f32 %v61, %v63
    %v66 = vadd.f32 %v64, %v65
    %67 = vadd.xlane.f32.xlu0 %v66
    %v68 = vpop.xlane.xlu0 %67
    %v69 = vrot.slane %v68, 4
    %v70 = vadd.f32 %v68, %v69
    %v71 = vrot.slane %v70, 2
    %v72 = vadd.f32 %v70, %v71
    %v73 = vrot.slane %v72, 1
    %v74 = vadd.f32 %v72, %v73
    %s75 = vtos %v74
    %s76 = scalar_lea.smem [#allocation8], 0
    %77 = sst [smem:[%s76]] %s75
    // Predicated region
    $region18: #{tpu_custom_call.1} parent=1 // pred_check
      _
    $region19: #{tpu_custom_call.1} parent=1 // pred_check_branch
      %79 = sbr.rel (0) target = $region21
    $region20: #{tpu_custom_call.1} parent=1 // pred_region
      %s81 = ssub.s32 16, 16
      %82 = vsyncadd [#allocation5], %s81
      %85 = dma.smem_to_hbm [#allocation8], 16, %s2, [#allocation5]
    $region21: #{tpu_custom_call.1} parent=1 // pred_fallthru
      _
    // Predicated region
    $region22: #{tpu_custom_call.1} parent=1 // pred_check
      _
    $region23: #{tpu_custom_call.1} parent=1 // pred_check_branch
      %87 = sbr.rel (0) target = $region25
    $region24: #{tpu_custom_call.1} parent=1 // pred_region
      %88 = dma.done [#allocation5], 16
    $region25: #{tpu_custom_call.1} parent=1 // pred_fallthru
      _
    %89 = sfence
    %90 = vsyncpa [#allocation4], 1
    %91 = vsyncpa [#allocation7], 1
    %92 = vsyncpa [#allocation5], 1

</llo_original>
